<compile_context>
chip_gen: v7x
topology: tpu7x:2x2x1
jax: 0.10.0
libtpu: 0.0.40
codegen_flags: <defaults>
</compile_context>

<pallas_src>
import functools

import jax
import jax.numpy as jnp
from jax.experimental import pallas as pl
from jax.experimental.pallas import tpu as pltpu

_LANES = 128
_SUBLANES = 8


def _l_color_kernel(x_ref, o_ref, acc_ref, *, hw, rows, s_rows, num_tiles):
    # x_ref block : (1, 3, s_rows, 128)  fully packed spatial tile
    # o_ref block : (1, 1, 1, 1)         per-batch-element scalar
    # acc_ref     : (3, 8, 128) f32      running per-tile partial sums
    c = acc_ref.shape[0]
    j = pl.program_id(1)

    @pl.when(j == 0)
    def _init():
        acc_ref[...] = jnp.zeros_like(acc_ref)

    def accumulate(x):
        # x: (c, s_rows, 128) f32.  Fold groups of 8 sublane-rows into the
        # (c, 8, 128) accumulator: pure VALU adds, no cross-lane traffic.
        full = (s_rows // _SUBLANES) * _SUBLANES
        if full > 0:
            acc_ref[...] += x[:, :full, :].reshape(
                c, full // _SUBLANES, _SUBLANES, _LANES).sum(axis=1)
        rem = s_rows - full
        if rem > 0:  # only for tiny single-tile inputs (s_rows < 8 or unaligned)
            acc_ref[:, :rem, :] += x[:, full:, :]

    x = x_ref[0].astype(jnp.float32)

    if rows % s_rows != 0:
        # Ragged last tile: rows past the array end hold unspecified data and
        # must be masked before accumulation (no wrapper-side pad).
        last = num_tiles - 1
        valid = rows - last * s_rows  # static Python int, 0 < valid < s_rows

        @pl.when(j != last)
        def _full_tile():
            accumulate(x)

        @pl.when(j == last)
        def _ragged_tile():
            ridx = jax.lax.broadcasted_iota(jnp.int32, (c, s_rows, _LANES), 1)
            accumulate(jnp.where(ridx < valid, x, 0.0))
    else:
        accumulate(x)

    @pl.when(j == num_tiles - 1)
    def _finalize():
        # One cross-lane (XLU) reduction per batch element.
        red = jnp.sum(acc_ref[...], axis=1)            # (c, 128) sublane reduce
        tot = jnp.sum(red, axis=1, keepdims=True)      # (c, 1)   lane reduce
        mean_rgb = tot * (1.0 / float(hw))
        mr = mean_rgb[0:1, :]
        mg = mean_rgb[1:2, :]
        mb = mean_rgb[2:3, :]
        Drg = (mr - mg) ** 2
        Drb = (mr - mb) ** 2
        Dgb = (mb - mg) ** 2
        # NOTE: the double squaring matches the original PyTorch code.
        k = jnp.sqrt(Drg ** 2 + Drb ** 2 + Dgb ** 2)   # (1, 1)
        o_ref[...] = k.reshape(1, 1, 1, 1).astype(o_ref.dtype)


def l_color(x, *, max_tile_elems=256 * 1024):
    """x: (b, 3, h, w) float array -> (b, 1, 1, 1), same dtype as x."""
    b, c, h, w = x.shape
    assert c == 3, "L_color expects 3 channels (RGB)"
    hw = h * w

    rows = pl.cdiv(hw, _LANES)
    xf = x.reshape(b, c, hw)
    if hw % _LANES != 0:
        # TODO(synk): this lane pad is a full HBM copy; avoiding it entirely
        # would need manual DMA over the flat layout.  It only triggers when
        # h*w is not a multiple of 128.
        xf = jnp.pad(xf, ((0, 0), (0, 0), (0, rows * _LANES - hw)))
    xr = xf.reshape(b, c, rows, _LANES)   # free reshape (layout-compatible)

    # Rows per tile: a single exact tile when the image fits (block dim equals
    # the full array dim, always legal even if not 8-aligned), otherwise
    # balanced 8-aligned tiles with an in-kernel-masked ragged tail.
    max_rows = max(_SUBLANES, max_tile_elems // _LANES)
    if rows <= max_rows:
        s_rows, num_tiles = rows, 1
    else:
        nt = pl.cdiv(rows, max_rows)
        s_rows = pl.cdiv(pl.cdiv(rows, nt), _SUBLANES) * _SUBLANES
        num_tiles = pl.cdiv(rows, s_rows)

    kernel = functools.partial(
        _l_color_kernel, hw=hw, rows=rows, s_rows=s_rows, num_tiles=num_tiles)

    # TODO(synk): on v7x with b == 1, add a size-2 parallel grid axis that
    # splits num_tiles across the two TensorCores (per-core partial outputs
    # combined in the wrapper) to use both cores' HBM streaming bandwidth.
    return pl.pallas_call(
        kernel,
        out_shape=jax.ShapeDtypeStruct((b, 1, 1, 1), x.dtype),
        grid_spec=pltpu.PrefetchScalarGridSpec(
            num_scalar_prefetch=0,
            grid=(b, num_tiles),
            in_specs=[
                pl.BlockSpec((1, c, s_rows, _LANES), lambda i, j: (i, 0, j, 0)),
            ],
            out_specs=pl.BlockSpec((1, 1, 1, 1), lambda i, j: (i, 0, 0, 0)),
            scratch_shapes=[pltpu.VMEM((c, _SUBLANES, _LANES), jnp.float32)],
        ),
        compiler_params=pltpu.CompilerParams(
            dimension_semantics=("parallel", "arbitrary"),
        ),
    )(xr)


def l_color_ref(x):
    """Pure-JAX reference matching the PyTorch forward."""
    mean_rgb = jnp.mean(x, axis=(2, 3), keepdims=True)        # (b, 3, 1, 1)
    mr = mean_rgb[:, 0:1]
    mg = mean_rgb[:, 1:2]
    mb = mean_rgb[:, 2:3]
    Drg = (mr - mg) ** 2
    Drb = (mr - mb) ** 2
    Dgb = (mb - mg) ** 2
    return jnp.sqrt(Drg ** 2 + Drb ** 2 + Dgb ** 2)


if __name__ == "__main__":
    key = jax.random.PRNGKey(0)
    k0, k1 = jax.random.split(key)

    # Primary check: spec-sized input (single exact tile path).
    b, c, h, w = 2, 3, 16, 16
    x = jax.random.uniform(k0, (b, c, h, w), dtype=jnp.float32)
    out = jax.block_until_ready(l_color(x))
    ref = l_color_ref(x)
    assert out.shape == (b, 1, 1, 1), out.shape
    assert out.dtype == x.dtype, out.dtype
    assert jnp.allclose(out, ref, atol=1e-5, rtol=1e-5), (out, ref)

    # Secondary check: HW not a multiple of 128 + multi-tile grid with a
    # ragged last tile (exercises the in-kernel mask path).
    x2 = jax.random.uniform(k1, (1, 3, 40, 40), dtype=jnp.float32)
    out2 = jax.block_until_ready(l_color(x2, max_tile_elems=8 * 128))
    ref2 = l_color_ref(x2)
    assert jnp.allclose(out2, ref2, atol=1e-5, rtol=1e-5), (out2, ref2)

    print("KERNEL_OK")
</pallas_src>

<mosaic_0001>
module attributes {stable_mosaic.version = 11 : i64} {
  func.func @_l_color_kernel(%arg0: i32, %arg1: i32, %arg2: memref<1x3x2x128xf32, #tpu.memory_space<vmem>>, %arg3: memref<1x1x1x1xf32, #tpu.memory_space<vmem>>, %arg4: memref<3x8x128xf32, #tpu.memory_space<vmem>>) attributes {dimension_semantics = [#tpu.dimension_semantics<parallel>, #tpu.dimension_semantics<arbitrary>], iteration_bounds = array<i64: 2, 1>, scalar_prefetch = 0 : i64, scratch_operands = 1 : i64, tpu.core_type = #tpu.core_type<tc>, window_params = [{transform_indices = @transform_0, window_bounds = array<i64: 1, 3, 2, 128>}, {transform_indices = @transform_1, window_bounds = array<i64: 1, 1, 1, 1>}]} {
    %c0_i32 = arith.constant 0 : i32
    %0 = arith.cmpi eq, %arg1, %c0_i32 : i32
    %1 = arith.extui %0 : i1 to i32
    %c0_i32_0 = arith.constant 0 : i32
    %2 = arith.cmpi ne, %1, %c0_i32_0 : i32
    scf.if %2 {
      %cst = arith.constant 0.000000e+00 : f32
      %11 = vector.broadcast %cst : f32 to vector<3x8x128xf32>
      %c0_12 = arith.constant 0 : index
      %c0_13 = arith.constant 0 : index
      %c0_14 = arith.constant 0 : index
      %12 = vector.load %arg4[%c0_12, %c0_13, %c0_14] : memref<3x8x128xf32, #tpu.memory_space<vmem>>, vector<3x8x128xf32>
      tpu.vector_store %arg4[%c0_12, %c0_13, %c0_14], %11 {strides = array<i32>} : memref<3x8x128xf32, #tpu.memory_space<vmem>>, vector<3x8x128xf32>,
    } else {
    }
    %c0 = arith.constant 0 : index
    %c0_1 = arith.constant 0 : index
    %c0_2 = arith.constant 0 : index
    %c0_3 = arith.constant 0 : index
    %3 = vector.load %arg2[%c0, %c0_1, %c0_2, %c0_3] : memref<1x3x2x128xf32, #tpu.memory_space<vmem>>, vector<1x3x2x128xf32>
    %4 = vector.shape_cast %3 : vector<1x3x2x128xf32> to vector<3x2x128xf32>
    %c0_4 = arith.constant 0 : index
    %c0_5 = arith.constant 0 : index
    %c0_6 = arith.constant 0 : index
    %5 = vector.load %arg4[%c0_4, %c0_5, %c0_6] : memref<3x8x128xf32, #tpu.memory_space<vmem>>, vector<3x2x128xf32>
    %6 = arith.addf %5, %4 : vector<3x2x128xf32>
    %c0_7 = arith.constant 0 : index
    %c0_8 = arith.constant 0 : index
    %c0_9 = arith.constant 0 : index
    %7 = vector.load %arg4[%c0_7, %c0_8, %c0_9] : memref<3x8x128xf32, #tpu.memory_space<vmem>>, vector<3x2x128xf32>
    tpu.vector_store %arg4[%c0_7, %c0_8, %c0_9], %6 {strides = array<i32>} : memref<3x8x128xf32, #tpu.memory_space<vmem>>, vector<3x2x128xf32>,
    %c0_i32_10 = arith.constant 0 : i32
    %8 = arith.cmpi eq, %arg1, %c0_i32_10 : i32
    %9 = arith.extui %8 : i1 to i32
    %c0_i32_11 = arith.constant 0 : i32
    %10 = arith.cmpi ne, %9, %c0_i32_11 : i32
    scf.if %10 {
      %c0_12 = arith.constant 0 : index
      %c0_13 = arith.constant 0 : index
      %c0_14 = arith.constant 0 : index
      %11 = vector.load %arg4[%c0_12, %c0_13, %c0_14] : memref<3x8x128xf32, #tpu.memory_space<vmem>>, vector<3x8x128xf32>
      %cst = arith.constant dense<0.000000e+00> : vector<3x128xf32>
      %12 = vector.multi_reduction <add>, %11, %cst [1] : vector<3x8x128xf32> to vector<3x128xf32>
      %cst_15 = arith.constant dense<0.000000e+00> : vector<3xf32>
      %13 = vector.multi_reduction <add>, %12, %cst_15 [1] : vector<3x128xf32> to vector<3xf32>
      %14 = vector.shape_cast %13 : vector<3xf32> to vector<3x1xf32>
      %cst_16 = arith.constant 3.906250e-03 : f32
      %15 = vector.broadcast %cst_16 : f32 to vector<3x1xf32>
      %16 = arith.mulf %14, %15 : vector<3x1xf32>
      %17 = vector.extract_strided_slice %16 {offsets = [0, 0], sizes = [1, 1], strides = [1, 1]} : vector<3x1xf32> to vector<1x1xf32>
      %18 = vector.extract_strided_slice %16 {offsets = [1, 0], sizes = [1, 1], strides = [1, 1]} : vector<3x1xf32> to vector<1x1xf32>
      %19 = vector.extract_strided_slice %16 {offsets = [2, 0], sizes = [1, 1], strides = [1, 1]} : vector<3x1xf32> to vector<1x1xf32>
      %20 = arith.subf %17, %18 : vector<1x1xf32>
      %21 = arith.mulf %20, %20 : vector<1x1xf32>
      %22 = arith.subf %17, %19 : vector<1x1xf32>
      %23 = arith.mulf %22, %22 : vector<1x1xf32>
      %24 = arith.subf %19, %18 : vector<1x1xf32>
      %25 = arith.mulf %24, %24 : vector<1x1xf32>
      %26 = arith.mulf %21, %21 : vector<1x1xf32>
      %27 = arith.mulf %23, %23 : vector<1x1xf32>
      %28 = arith.addf %26, %27 : vector<1x1xf32>
      %29 = arith.mulf %25, %25 : vector<1x1xf32>
      %30 = arith.addf %28, %29 : vector<1x1xf32>
      %31 = math.sqrt %30 : vector<1x1xf32>
      %32 = vector.shape_cast %31 : vector<1x1xf32> to vector<1x1x1x1xf32>
      %c0_17 = arith.constant 0 : index
      %c0_18 = arith.constant 0 : index
      %c0_19 = arith.constant 0 : index
      %c0_20 = arith.constant 0 : index
      %33 = vector.load %arg3[%c0_17, %c0_18, %c0_19, %c0_20] : memref<1x1x1x1xf32, #tpu.memory_space<vmem>>, vector<1x1x1x1xf32>
      tpu.vector_store %arg3[%c0_17, %c0_18, %c0_19, %c0_20], %32 {strides = array<i32>} : memref<1x1x1x1xf32, #tpu.memory_space<vmem>>, vector<1x1x1x1xf32>,
    } else {
    }
    return
  }
  func.func @transform_0(%arg0: i32, %arg1: i32) -> (i32, i32, i32, i32) {
    %c0_i32 = arith.constant 0 : i32
    %c0_i32_0 = arith.constant 0 : i32
    %c0_i32_1 = arith.constant 0 : i32
    return %arg0, %c0_i32, %arg1, %c0_i32_0 : i32, i32, i32, i32
  }
  func.func @transform_1(%arg0: i32, %arg1: i32) -> (i32, i32, i32, i32) {
    %c0_i32 = arith.constant 0 : i32
    %c0_i32_0 = arith.constant 0 : i32
    %c0_i32_1 = arith.constant 0 : i32
    %c0_i32_2 = arith.constant 0 : i32
    return %arg0, %c0_i32, %c0_i32_0, %c0_i32_1 : i32, i32, i32, i32
  }
}

</mosaic_0001>

<llo_original>
// kernel: tpu_custom_call.1
$region0: #{tpu_custom_call.1}
  #allocation0 [shape = 'u32[]', space=smem, size = 0x4, offset = 0x4, fixed_abs, tag = 'smem constant byte address 0x4 - core index']
  #allocation1 [shape = 'u32[144,128]{1,0:T(1,128)}', space=vmem, size = 0x12000, scoped, tag = 'internal scratch']
  #allocation2 [shape = 'f32[3,8,128]{2,1,0:T(8,128)}', space=vmem, size = 0x3000, scoped, tag = 'scratch operand']
  %s0 = inlined_call_operand.hbm [shape: f32[2,3,2,128], index: 0, kind: input, shape index: {}]
  %s1 = inlined_call_operand.vmem [shape: f32[2,1,1,1], index: 1, kind: output, shape index: {}]
  %s2 = sld [smem:[#allocation0]]
  $region49: #{tpu_custom_call.1} parent=0
    _
  %s4 = ssub.s32 1, %s2
  %s5 = scalar_select 0, %s4, %s2
  $region1: #{tpu_custom_call.1} parent=0
    #allocation3 [shape = 'u8[6144]{0}', space=vmem, size = 0x1800, scoped, tag = 'input window, operand 0']
    #allocation4 [shape = 's32[2]{0}', space=sflag, size = 0x8, scoped, tag = 'scoped memory for tpu_custom_call.1']
    %6 = vsyncpa [#allocation4], 0
    %s7 = scalar_lea.sflag [#allocation4], 1
    %8 = vsyncpa %s7, 0
    loop: start=0, step=1, limit=4
    $region2: #{tpu_custom_call.1} parent=1 // loop_pre_header
      _
    $region3: #{tpu_custom_call.1} parent=1 // loop_header
      %s10 = sphi 0, %s14
      %p11 = scmp.ge.s32.totalorder %s10, 4
      %s17 = sphi 0, %s29
      %s18 = sphi 0, %s25
      %s19 = sphi 0, %s17
      %s20 = sphi 0, %s18
      %s21 = sphi 0, %s19
      %s22 = sphi 0, %s20
      %s34 = sphi 0, %s36
      %s37 = sphi 0, %s34
      %s38 = sphi 0, %s37
      %s54 = sphi 0, %s38
      %s60 = sphi 0, %s62
      %s63 = sphi 0, %s60
      %s64 = sphi 0, %s63
      %s80 = sphi 0, %s64
    $region4: #{tpu_custom_call.1} parent=1 // loop_header_branch
      %13 = sbr.rel (%p11) target = $region8
    $region5: #{tpu_custom_call.1} parent=1 // loop_body
      %s15 = ssub.s32 %s10, 1
      %s16 = ssub.s32 %s10, 2
      %s23 = sadd.s32 1, %s18
      %p24 = scmp.ge.s32.totalorder %s23, 1
      %s25 = scalar_select %p24, 0, %s23
      %s26 = sadd.s32 1, %s17
      %s27 = scalar_select %p24, %s26, %s17
      %p28 = scmp.ge.s32.totalorder %s27, 2
      %s29 = scalar_select %p28, 0, %s27
      %s30 = ssub.s32 %s17, %s29
      %s31 = ssub.s32 %s18, %s25
      %s32 = sor.u32 %s30, %s31
      %p33 = scmp.eq.s32.totalorder %s32, 0
      %s35 = sadd.s32 %s34, 1
      %s36 = scalar_select %p33, %s34, %s35
      %p39 = pneg %p33
      %p40 = scmp.eq.s32.totalorder %s10, 1
      %p41 = por %p39, %p40
      %p42 = scmp.ne.s32.totalorder %s34, %s37
      %p43 = scmp.eq.s32.totalorder %s10, 0
      %p44 = por %p42, %p43
      %p45 = scmp.ne.s32.totalorder %s34, %s37
      %p46 = scmp.eq.s32.totalorder %s15, 1
      %p47 = por %p45, %p46
      %p48 = scmp.ne.s32.totalorder %s37, %s38
      %p49 = scmp.eq.s32.totalorder %s15, 0
      %p50 = por %p48, %p49
      %p51 = scmp.ne.s32.totalorder %s37, %s38
      %p52 = scmp.eq.s32.totalorder %s16, 1
      %p53 = por %p51, %p52
      %p55 = scmp.ne.s32.totalorder %s38, %s54
      %p56 = scmp.eq.s32.totalorder %s16, 0
      %p57 = por %p55, %p56
      %s58 = ssub.s32 %s17, %s29
      %p59 = scmp.eq.s32.totalorder %s58, 0
      %s61 = sadd.s32 %s60, 1
      %s62 = scalar_select %p59, %s60, %s61
      %p65 = pneg %p59
      %p66 = scmp.eq.s32.totalorder %s10, 1
      %p67 = por %p65, %p66
      %p68 = scmp.ne.s32.totalorder %s60, %s63
      %p69 = scmp.eq.s32.totalorder %s10, 0
      %p70 = por %p68, %p69
      %p71 = scmp.ne.s32.totalorder %s60, %s63
      %p72 = scmp.eq.s32.totalorder %s15, 1
      %p73 = por %p71, %p72
      %p74 = scmp.ne.s32.totalorder %s63, %s64
      %p75 = scmp.eq.s32.totalorder %s15, 0
      %p76 = por %p74, %p75
      %p77 = scmp.ne.s32.totalorder %s63, %s64
      %p78 = scmp.eq.s32.totalorder %s16, 1
      %p79 = por %p77, %p78
      %p81 = scmp.ne.s32.totalorder %s64, %s80
      %p82 = scmp.eq.s32.totalorder %s16, 0
      %p83 = por %p81, %p82
      %p84 = scmp.le.s32.totalorder 1, %s10
      %p85 = scmp.lt.s32.totalorder %s10, 3
      %p86 = pnand %p84, %p85
      %p87 = pneg %p86
      // Predicated region
      $region9: #{tpu_custom_call.1} parent=5 // pred_check
        _
      $region10: #{tpu_custom_call.1} parent=5 // pred_check_branch
        %89 = sbr.rel (%p86) target = $region12
      $region11: #{tpu_custom_call.1} parent=5 // pred_region
        %s90 = ssub.s32 %s10, 1
      $region12: #{tpu_custom_call.1} parent=5 // pred_fallthru
        _
      %p91 = scmp.lt.s32.totalorder %s10, 2
      // Predicated region
      $region13: #{tpu_custom_call.1} parent=5 // pred_check
        %p92 = pneg %p91
      $region14: #{tpu_custom_call.1} parent=5 // pred_check_branch
        %94 = sbr.rel (%p92) target = $region16
      $region15: #{tpu_custom_call.1} parent=5 // pred_region
        // Predicated region
        $region17: #{tpu_custom_call.1} parent=15 // pred_check
          %p95 = pneg %p44
        $region18: #{tpu_custom_call.1} parent=15 // pred_check_branch
          %97 = sbr.rel (%p95) target = $region20
        $region19: #{tpu_custom_call.1} parent=15 // pred_region
          %s98 = sand.u32 %s34, 1
          %s99 = scalar_lea.sflag [#allocation4], %s98
          %s100 = sand.u32 %s34, 1
          %s101 = smul.addr %s100, 6
          %s102 = scalar_lea.vmem [#allocation3], %s101
          %s104 = ssub.s32 96, 96
          %105 = vsyncadd %s99, %s104
          %s106 = smul.addr %s17, 3
          %s107 = sadd.s32 %s18, %s106
          %s108 = smul.addr %s107, 32
          %s109 = scalar_lea.hbm %s0, %s108
          %s110 = sshll.u32 %s102, 4
          %s111 = int_to_ptr.vmem [resolvable:$true] %s110
          %116 = dma.hbm_to_vmem [thread:$0]  %s109, 96, %s111, %s99, 32, 32, 2
        $region20: #{tpu_custom_call.1} parent=15 // pred_fallthru
          _
      $region16: #{tpu_custom_call.1} parent=5 // pred_fallthru
        _
      %p117 = scmp.le.s32.totalorder 1, %s10
      %p118 = scmp.lt.s32.totalorder %s10, 3
      %p119 = pnand %p117, %p118
      %p120 = pneg %p119
      // Predicated region
      $region21: #{tpu_custom_call.1} parent=5 // pred_check
        _
      $region22: #{tpu_custom_call.1} parent=5 // pred_check_branch
        %122 = sbr.rel (%p119) target = $region24
      $region23: #{tpu_custom_call.1} parent=5 // pred_region
        %s123 = ssub.s32 %s10, 1
        %s124 = sand.u32 %s37, 1
        %s125 = scalar_lea.sflag [#allocation4], %s124
        %s126 = sand.u32 %s37, 1
        %s127 = smul.addr %s126, 6
        %s128 = scalar_lea.vmem [#allocation3], %s127
        // Predicated region
        $region25: #{tpu_custom_call.1} parent=23 // pred_check
          %p129 = pneg %p50
        $region26: #{tpu_custom_call.1} parent=23 // pred_check_branch
          %131 = sbr.rel (%p129) target = $region28
        $region27: #{tpu_custom_call.1} parent=23 // pred_region
          %132 = dma.done %s125, 96
        $region28: #{tpu_custom_call.1} parent=23 // pred_fallthru
          _
        %s133 = sand.u32 %s37, 1
        %s134 = scalar_lea.sflag [#allocation4], %s133
        %s135 = sand.u32 %s37, 1
        %s136 = smul.addr %s135, 6
        %s137 = scalar_lea.vmem [#allocation3], %s136
        %p138 = pneg %p50
        %p139 = pneg %p47
        %p140 = pneg %p76
        %p141 = pneg %p73
        %p142 = scmp.lt.s32.totalorder %s19, 1
        %s143 = scalar_select %p142, %s19, 1
        %s144 = scalar_lea.vmem %s1, %s143
        %p145 = scmp.lt.s32.totalorder %s19, 1
        %s146 = scalar_select %p145, %s19, 1
        %s147 = scalar_lea.vmem %s1, %s146
        %p148 = scmp.eq.s32.totalorder %s20, 0
        // Predicated region
        $region29: #{tpu_custom_call.1} parent=23 // pred_check
          %p149 = pneg %p148
        $region30: #{tpu_custom_call.1} parent=23 // pred_check_branch
          %151 = sbr.rel (%p149) target = $region32
        $region31: #{tpu_custom_call.1} parent=23 // pred_region
          %152 = vst [vmem:[#allocation2] sm:$0xff] 0.0
          %153 = vst [vmem:[#allocation2 + $0x8] sm:$0xff] 0.0
          %154 = vst [vmem:[#allocation2 + $0x10] sm:$0xff] 0.0
        $region32: #{tpu_custom_call.1} parent=23 // pred_fallthru
          _
        %v155 = vld [vmem:[%s128] sm:$0x3]
        %v156 = vld [vmem:[%s128 + $0x2] sm:$0x3]
        %v157 = vld [vmem:[%s128 + $0x4] sm:$0x3]
        %v158 = vld [vmem:[#allocation2] sm:$0x3]
        %v159 = vld [vmem:[#allocation2 + $0x8] sm:$0x3]
        %v160 = vld [vmem:[#allocation2 + $0x10] sm:$0x3]
        %v161 = vadd.f32 %v158, %v155
        %v162 = vadd.f32 %v159, %v156
        %v163 = vadd.f32 %v160, %v157
        %164 = vst [vmem:[#allocation2] sm:$0x3] %v161
        %165 = vst [vmem:[#allocation2 + $0x8] sm:$0x3] %v162
        %166 = vst [vmem:[#allocation2 + $0x10] sm:$0x3] %v163
        // Predicated region
        $region33: #{tpu_custom_call.1} parent=23 // pred_check
          %p167 = pneg %p148
        $region34: #{tpu_custom_call.1} parent=23 // pred_check_branch
          %169 = sbr.rel (%p167) target = $region36
        $region35: #{tpu_custom_call.1} parent=23 // pred_region
          %v170 = vld [vmem:[#allocation2] sm:$0xff]
          %v171 = vld [vmem:[#allocation2 + $0x8] sm:$0xff]
          %v172 = vld [vmem:[#allocation2 + $0x10] sm:$0xff]
          %v173 = vrot.slane %v170, 4
          %v174 = vadd.f32 %v170, %v173
          %v175 = vrot.slane %v174, 2
          %v176 = vadd.f32 %v174, %v175
          %v177 = vrot.slane %v176, 1
          %v178 = vadd.f32 %v176, %v177
          %v179 = vrot.slane %v171, 4
          %v180 = vadd.f32 %v171, %v179
          %v181 = vrot.slane %v180, 2
          %v182 = vadd.f32 %v180, %v181
          %v183 = vrot.slane %v182, 1
          %v184 = vadd.f32 %v182, %v183
          %v185 = vrot.slane %v172, 4
          %v186 = vadd.f32 %v172, %v185
          %v187 = vrot.slane %v186, 2
          %v188 = vadd.f32 %v186, %v187
          %v189 = vrot.slane %v188, 1
          %v190 = vadd.f32 %v188, %v189
          %vm194 = vcmask 1041409
          %v195 = vsel %vm194, %v184, %v178
          %vm196 = vcmask 1042434
          %v197 = vsel %vm196, %v190, %v195
          %vm199 = vcmask 1042432
          %v200 = vsel %vm199, %v197, 0.0
          %201 = vadd.xlane.f32.xlu0 %v200
          %v202 = vpop.xlane.xlu0 %201
          %v203 = vmul.f32 %v202, 0.00390625
          %v205 = vrot.slane %v203, 1
          %v207 = vsub.f32 %v203, %v205
          %v208 = vmul.f32 %v207, %v207
          %v209 = vrot.slane %v203, 2
          %v211 = vsub.f32 %v203, %v209
          %v212 = vmul.f32 %v211, %v211
          %v213 = vrot.slane %v203, 7
          %v215 = vsub.f32 %v203, %v213
          %v216 = vmul.f32 %v215, %v215
          %v217 = vmul.f32 %v208, %v208
          %v218 = vmul.f32 %v212, %v212
          %v219 = vadd.f32 %v217, %v218
          %v220 = vmul.f32 %v216, %v216
          %v222 = vrot.slane %v220, 2
          %v224 = vadd.f32 %v219, %v222
          %v225 = vrsqrt.pop %v224
          %v226 = vmul.f32 %v224, %v225
          %vm227 = vcmp.eq.f32.partialorder %v224, inf
          %v228 = vsel %vm227, %v224, %v226
          %vm229 = vcmp.eq.f32.partialorder %v224, 0.0
          %v230 = vand.u32 %v224, 2147483648
          %v231 = vsel %vm229, %v230, %v228
          %vm232 = vcmask 0
          %233 = vst.msk [vmem:[%s147] sm:$0x1] %vm232, %v231
        $region36: #{tpu_custom_call.1} parent=23 // pred_fallthru
          _
        %p234 = scmp.lt.s32.totalorder %s19, 1
        %s235 = scalar_select %p234, %s19, 1
        %s236 = scalar_lea.vmem %s1, %s235
        // Predicated region
        $region37: #{tpu_custom_call.1} parent=23 // pred_check
          %p237 = pneg %p73
        $region38: #{tpu_custom_call.1} parent=23 // pred_check_branch
          %239 = sbr.rel (%p237) target = $region40
        $region39: #{tpu_custom_call.1} parent=23 // pred_region
          _
        $region40: #{tpu_custom_call.1} parent=23 // pred_fallthru
          _
      $region24: #{tpu_custom_call.1} parent=5 // pred_fallthru
        _
      %p240 = scmp.le.s32.totalorder 2, %s10
      // Predicated region
      $region41: #{tpu_custom_call.1} parent=5 // pred_check
        %p241 = pneg %p240
      $region42: #{tpu_custom_call.1} parent=5 // pred_check_branch
        %243 = sbr.rel (%p241) target = $region44
      $region43: #{tpu_custom_call.1} parent=5 // pred_region
        %s244 = ssub.s32 %s10, 2
        // Predicated region
        $region45: #{tpu_custom_call.1} parent=43 // pred_check
          %p245 = pneg %p79
        $region46: #{tpu_custom_call.1} parent=43 // pred_check_branch
          %247 = sbr.rel (%p245) target = $region48
        $region47: #{tpu_custom_call.1} parent=43 // pred_region
          %p248 = scmp.lt.s32.totalorder %s21, 1
          %s249 = scalar_select %p248, %s21, 1
          %s250 = scalar_lea.vmem %s1, %s249
        $region48: #{tpu_custom_call.1} parent=43 // pred_fallthru
          _
      $region44: #{tpu_custom_call.1} parent=5 // pred_fallthru
        _
    $region6: #{tpu_custom_call.1} parent=1 // loop_footer
      %s14 = sadd.s32 1, %s10
    $region7: #{tpu_custom_call.1} parent=1 // loop_footer_branch
      %9 = sbr.rel target = $region3
    $region8: #{tpu_custom_call.1} parent=1 // loop_exit
      _
    %251 = vsyncpa [#allocation4], 1
    %s252 = scalar_lea.sflag [#allocation4], 1
    %253 = vsyncpa %s252, 1

</llo_original>
